<compile_context>
chip_gen: v5e
topology: v5e:2x2
jax: 0.10.0
libtpu: 0.0.40
codegen_flags: <defaults>
</compile_context>

<pallas_src>
import math

import jax
import jax.numpy as jnp
from jax import lax
from jax.experimental import pallas as pl
from jax.experimental.pallas import tpu as pltpu


def _coefficient_kernel(x_ref, w1_ref, b1_ref, w2_ref, b2_ref, w3_ref, b3_ref,
                        out_ref):
    """Fused 2-hidden-layer ReLU MLP + softmax, computed transposed so the batch
    dimension rides the 128-lane axis.

      x_ref:   (TB, lsd)        state block (batch-major, as stored in HBM)
      w*_ref:  (out_d, in_d)    PyTorch nn.Linear weight layout
      b*_ref:  (out_d, 1)
      out_ref: (num_basis, TB)  lane-dense softmax coefficients (transposed)
    """

    def _mm(w, rhs, rhs_contract):
        # MXU matmul with f32 accumulation; promote dtypes explicitly so
        # bf16 x bf16 feeds the MXU natively while bf16 x f32 runs in f32.
        dt = jnp.promote_types(w.dtype, rhs.dtype)
        return lax.dot_general(
            w.astype(dt), rhs.astype(dt),
            dimension_numbers=(((1,), (rhs_contract,)), ((), ())),
            preferred_element_type=jnp.float32)

    x = x_ref[...]                                     # (TB, lsd)

    # h1 = relu(W1 @ x^T + b1): contract the last dims of both operands so the
    # MXU consumes the batch-major x block without a materialized transpose.
    h = _mm(w1_ref[...], x, 1) + b1_ref[...]           # (h1, TB)
    h = jnp.maximum(h, 0.0)

    # h2 = relu(W2 @ h1 + b2)
    h = _mm(w2_ref[...], h, 0) + b2_ref[...]           # (h2, TB)
    h = jnp.maximum(h, 0.0)

    # logits = W3 @ h2 + b3
    logits = _mm(w3_ref[...], h, 0) + b3_ref[...]      # (num_basis, TB)

    # Numerically-stable softmax over the num_basis (sublane) axis.
    m = jnp.max(logits, axis=0, keepdims=True)         # (1, TB)
    e = jnp.exp(logits - m)                            # (num_basis, TB)
    denom = jnp.sum(e, axis=0, keepdims=True)          # (1, TB)
    # EUP approx reciprocal (free slot) + one Newton step for f32 accuracy.
    inv = pl.reciprocal(denom, approx=True)
    inv = inv * (2.0 - denom * inv)
    out_ref[...] = (e * inv).astype(out_ref.dtype)     # lane-dense store


def _round_up(x, m):
    return ((x + m - 1) // m) * m


def coefficient_forward(state, params, *, block_b=8192, out_dtype=None):
    """Batch-tiled, pipelined forward pass of the Coefficient module.

    Returns (B, num_basis) softmax coefficients.  Internally the kernel emits a
    lane-dense (num_basis, B) slab which is transposed back in the wrapper.
    """
    w1, b1, w2, b2, w3, b3 = params
    B, lsd = state.shape
    h1, h2, nb = w1.shape[0], w2.shape[0], w3.shape[0]
    out_dtype = state.dtype if out_dtype is None else jnp.dtype(out_dtype)

    # ---- batch-tile selection (VMEM-derived, lane padding included) --------
    # Per grid step (f32):
    #   state block (tb, lsd=32): lanes pad to 128 -> tb*512 B  (x2 buffers)
    #   out block (nb=16, tb):                         tb* 64 B  (x2 buffers)
    #   resident weights/biases (lane-padded):        ~0.3 MiB
    # tb = 8192  =>  ~9.5 MiB total, well under the 32 MiB limit set below on
    # every generation (v7x has 64 MiB physical VMEM).
    if B <= 256:
        tb = B                                   # single full-extent block
    else:
        tb = min(block_b, 8192)
        # Guarantee >= 2 grid steps so v7x's second TensorCore gets work.
        tb = min(tb, _round_up(pl.cdiv(B, 2), 128))
        # Lane-dense (nb, tb) output blocks need tb to be a multiple of 128.
        tb = max(128, (tb // 128) * 128)
    grid = (pl.cdiv(B, tb),)

    weight_args = (w1, b1, w2, b2, w3, b3)
    in_specs = [pl.BlockSpec((tb, lsd), lambda i: (i, 0))] + [
        pl.BlockSpec(p.shape, lambda i: (0, 0)) for p in weight_args   # resident
    ]
    out_specs = pl.BlockSpec((nb, tb), lambda i: (0, i))               # lane-dense

    # Advisory cost estimate (matmuls + elementwise; exp/rcp on the EUP).
    flops = 2 * B * (lsd * h1 + h1 * h2 + h2 * nb) \
        + B * (2 * h1 + 2 * h2 + 4 * nb)
    transcendentals = B * nb + B                     # exp + reciprocal per row
    bytes_accessed = (
        state.size * state.dtype.itemsize
        + B * nb * out_dtype.itemsize
        + sum(int(p.size) * p.dtype.itemsize for p in weight_args))
    cost = pl.CostEstimate(flops=int(flops),
                           transcendentals=int(transcendentals),
                           bytes_accessed=int(bytes_accessed))

    out_t = pl.pallas_call(
        _coefficient_kernel,
        out_shape=jax.ShapeDtypeStruct((nb, B), out_dtype),
        grid=grid,
        in_specs=in_specs,
        out_specs=out_specs,
        compiler_params=pltpu.CompilerParams(
            dimension_semantics=("parallel",),        # megacore-shardable (v7x)
            vmem_limit_bytes=32 * 1024 * 1024),       # explicit, safe on v5e..v7x
        cost_estimate=cost,
    )(state, *weight_args)

    # Layout plumbing back to the module's (B, num_basis) contract.  Callers
    # that can consume a (num_basis, B) lane-major slab may skip this transpose.
    return out_t.T


def init_coefficient_params(key, lsd, num_hidden, num_basis, dtype=jnp.float32):
    """PyTorch nn.Linear-style init (U[-1/sqrt(in), 1/sqrt(in)]).
    Weights use the native PyTorch layout [out_dim, in_dim]; biases [out_dim, 1]."""
    dims = [lsd] + list(num_hidden) + [num_basis]
    params = []
    for din, dout in zip(dims[:-1], dims[1:]):
        key, kw, kb = jax.random.split(key, 3)
        bound = 1.0 / math.sqrt(din)
        w = jax.random.uniform(kw, (dout, din), dtype, -bound, bound)
        b = jax.random.uniform(kb, (dout, 1), dtype, -bound, bound)
        params += [w, b]
    return tuple(params)


def coefficient_reference(state, params):
    """Plain-JAX reference of the same forward pass (f32 math)."""
    w1, b1, w2, b2, w3, b3 = [p.astype(jnp.float32) for p in params]
    x = state.astype(jnp.float32)
    h = jnp.maximum(x @ w1.T + b1[:, 0], 0.0)
    h = jnp.maximum(h @ w2.T + b2[:, 0], 0.0)
    logits = h @ w3.T + b3[:, 0]
    return jax.nn.softmax(logits, axis=-1)


if __name__ == "__main__":
    LSD = 32
    NUM_HIDDEN = (64, 64)
    NUM_BASIS = 16

    key = jax.random.PRNGKey(0)
    key, k_state = jax.random.split(key)
    params = init_coefficient_params(key, LSD, NUM_HIDDEN, NUM_BASIS,
                                     dtype=jnp.float32)

    # --- small single-block case (B <= 256 -> one full-extent block) --------
    B = 64
    state = jax.random.normal(k_state, (B, LSD), dtype=jnp.float32)
    out = jax.block_until_ready(coefficient_forward(state, params))
    ref = coefficient_reference(state, params)
    assert out.shape == (B, NUM_BASIS)
    assert jnp.allclose(out, ref, atol=2e-4, rtol=2e-4), "f32 mismatch vs reference"
    assert jnp.allclose(jnp.sum(out, axis=-1), 1.0, atol=1e-4)

    # --- multi-step tiled case (exercises the 128-lane batch tiling / grid) --
    B2 = 512
    key, k2 = jax.random.split(key)
    state2 = jax.random.normal(k2, (B2, LSD), dtype=jnp.float32)
    out2 = jax.block_until_ready(coefficient_forward(state2, params, block_b=128))
    ref2 = coefficient_reference(state2, params)
    assert out2.shape == (B2, NUM_BASIS)
    assert jnp.allclose(out2, ref2, atol=2e-4, rtol=2e-4), "tiled f32 mismatch"
    assert jnp.allclose(jnp.sum(out2, axis=-1), 1.0, atol=1e-4)

    # --- bf16 bandwidth path: bf16 state/weights, f32 math in-kernel, bf16 out
    w1, b1, w2, b2, w3, b3 = params
    params_bf16 = (w1.astype(jnp.bfloat16), b1,
                   w2.astype(jnp.bfloat16), b2,
                   w3.astype(jnp.bfloat16), b3)
    state_bf16 = state2.astype(jnp.bfloat16)
    out_bf16 = jax.block_until_ready(
        coefficient_forward(state_bf16, params_bf16, block_b=128,
                            out_dtype=jnp.bfloat16))
    ref_bf16 = coefficient_reference(state_bf16, params_bf16)
    assert out_bf16.shape == (B2, NUM_BASIS)
    assert jnp.allclose(out_bf16.astype(jnp.float32), ref_bf16,
                        atol=2e-2, rtol=2e-2), "bf16 mismatch vs reference"
    assert jnp.allclose(jnp.sum(out_bf16.astype(jnp.float32), axis=-1), 1.0,
                        atol=3e-2)

    print("KERNEL_OK")
</pallas_src>

<mosaic_0001>
module attributes {stable_mosaic.version = 11 : i64} {
  func.func @_coefficient_kernel(%arg0: i32, %arg1: memref<64x32xf32, #tpu.memory_space<vmem>>, %arg2: memref<64x32xf32, #tpu.memory_space<vmem>>, %arg3: memref<64x1xf32, #tpu.memory_space<vmem>>, %arg4: memref<64x64xf32, #tpu.memory_space<vmem>>, %arg5: memref<64x1xf32, #tpu.memory_space<vmem>>, %arg6: memref<16x64xf32, #tpu.memory_space<vmem>>, %arg7: memref<16x1xf32, #tpu.memory_space<vmem>>, %arg8: memref<16x64xf32, #tpu.memory_space<vmem>>) attributes {dimension_semantics = [#tpu.dimension_semantics<parallel>], iteration_bounds = array<i64: 1>, scalar_prefetch = 0 : i64, scratch_operands = 0 : i64, tpu.core_type = #tpu.core_type<tc>, window_params = [{transform_indices = @transform_0, window_bounds = array<i64: 64, 32>}, {pipeline_mode = #tpu.pipeline_mode<synchronous>, transform_indices = @transform_1, window_bounds = array<i64: 64, 32>}, {pipeline_mode = #tpu.pipeline_mode<synchronous>, transform_indices = @transform_2, window_bounds = array<i64: 64, 1>}, {pipeline_mode = #tpu.pipeline_mode<synchronous>, transform_indices = @transform_3, window_bounds = array<i64: 64, 64>}, {pipeline_mode = #tpu.pipeline_mode<synchronous>, transform_indices = @transform_4, window_bounds = array<i64: 64, 1>}, {pipeline_mode = #tpu.pipeline_mode<synchronous>, transform_indices = @transform_5, window_bounds = array<i64: 16, 64>}, {pipeline_mode = #tpu.pipeline_mode<synchronous>, transform_indices = @transform_6, window_bounds = array<i64: 16, 1>}, {transform_indices = @transform_7, window_bounds = array<i64: 16, 64>}]} {
    %c0 = arith.constant 0 : index
    %c0_0 = arith.constant 0 : index
    %0 = vector.load %arg1[%c0, %c0_0] : memref<64x32xf32, #tpu.memory_space<vmem>>, vector<64x32xf32>
    %c0_1 = arith.constant 0 : index
    %c0_2 = arith.constant 0 : index
    %1 = vector.load %arg2[%c0_1, %c0_2] : memref<64x32xf32, #tpu.memory_space<vmem>>, vector<64x32xf32>
    %cst = arith.constant dense<0.000000e+00> : vector<64x64xf32>
    %2 = tpu.matmul %1, %0, %cst {dimension_numbers = #tpu.dot_dimension_numbers<[1], [1], [0], [0], [0, 0, 1, 0], [], []>} : vector<64x32xf32>, vector<64x32xf32>, vector<64x64xf32> -> vector<64x64xf32>
    %c0_3 = arith.constant 0 : index
    %c0_4 = arith.constant 0 : index
    %3 = vector.load %arg3[%c0_3, %c0_4] : memref<64x1xf32, #tpu.memory_space<vmem>>, vector<64x1xf32>
    %4 = vector.broadcast %3 : vector<64x1xf32> to vector<64x64xf32>
    %5 = arith.addf %2, %4 : vector<64x64xf32>
    %cst_5 = arith.constant 0.000000e+00 : f32
    %6 = vector.broadcast %cst_5 : f32 to vector<64x64xf32>
    %7 = arith.maximumf %5, %6 : vector<64x64xf32>
    %c0_6 = arith.constant 0 : index
    %c0_7 = arith.constant 0 : index
    %8 = vector.load %arg4[%c0_6, %c0_7] : memref<64x64xf32, #tpu.memory_space<vmem>>, vector<64x64xf32>
    %cst_8 = arith.constant dense<0.000000e+00> : vector<64x64xf32>
    %9 = tpu.matmul %8, %7, %cst_8 {dimension_numbers = #tpu.dot_dimension_numbers<[1], [0], [0], [1], [0, 0, 1, 1], [], []>} : vector<64x64xf32>, vector<64x64xf32>, vector<64x64xf32> -> vector<64x64xf32>
    %c0_9 = arith.constant 0 : index
    %c0_10 = arith.constant 0 : index
    %10 = vector.load %arg5[%c0_9, %c0_10] : memref<64x1xf32, #tpu.memory_space<vmem>>, vector<64x1xf32>
    %11 = vector.broadcast %10 : vector<64x1xf32> to vector<64x64xf32>
    %12 = arith.addf %9, %11 : vector<64x64xf32>
    %cst_11 = arith.constant 0.000000e+00 : f32
    %13 = vector.broadcast %cst_11 : f32 to vector<64x64xf32>
    %14 = arith.maximumf %12, %13 : vector<64x64xf32>
    %c0_12 = arith.constant 0 : index
    %c0_13 = arith.constant 0 : index
    %15 = vector.load %arg6[%c0_12, %c0_13] : memref<16x64xf32, #tpu.memory_space<vmem>>, vector<16x64xf32>
    %cst_14 = arith.constant dense<0.000000e+00> : vector<16x64xf32>
    %16 = tpu.matmul %15, %14, %cst_14 {dimension_numbers = #tpu.dot_dimension_numbers<[1], [0], [0], [1], [0, 0, 1, 1], [], []>} : vector<16x64xf32>, vector<64x64xf32>, vector<16x64xf32> -> vector<16x64xf32>
    %c0_15 = arith.constant 0 : index
    %c0_16 = arith.constant 0 : index
    %17 = vector.load %arg7[%c0_15, %c0_16] : memref<16x1xf32, #tpu.memory_space<vmem>>, vector<16x1xf32>
    %18 = vector.broadcast %17 : vector<16x1xf32> to vector<16x64xf32>
    %19 = arith.addf %16, %18 : vector<16x64xf32>
    %cst_17 = arith.constant dense<0xFF800000> : vector<64xf32>
    %20 = vector.multi_reduction <maximumf>, %19, %cst_17 [0] : vector<16x64xf32> to vector<64xf32>
    %21 = vector.shape_cast %20 : vector<64xf32> to vector<1x64xf32>
    %22 = vector.broadcast %21 : vector<1x64xf32> to vector<16x64xf32>
    %23 = arith.subf %19, %22 : vector<16x64xf32>
    %24 = math.exp %23 : vector<16x64xf32>
    %cst_18 = arith.constant dense<0.000000e+00> : vector<64xf32>
    %25 = vector.multi_reduction <add>, %24, %cst_18 [0] : vector<16x64xf32> to vector<64xf32>
    %26 = vector.shape_cast %25 : vector<64xf32> to vector<1x64xf32>
    %27 = tpu.reciprocal %26 {approx = true} : vector<1x64xf32> -> vector<1x64xf32>
    %28 = arith.mulf %26, %27 : vector<1x64xf32>
    %cst_19 = arith.constant 2.000000e+00 : f32
    %29 = vector.broadcast %cst_19 : f32 to vector<1x64xf32>
    %30 = arith.subf %29, %28 : vector<1x64xf32>
    %31 = arith.mulf %27, %30 : vector<1x64xf32>
    %32 = vector.broadcast %31 : vector<1x64xf32> to vector<16x64xf32>
    %33 = arith.mulf %24, %32 : vector<16x64xf32>
    %c0_20 = arith.constant 0 : index
    %c0_21 = arith.constant 0 : index
    %34 = vector.load %arg8[%c0_20, %c0_21] : memref<16x64xf32, #tpu.memory_space<vmem>>, vector<16x64xf32>
    tpu.vector_store %arg8[%c0_20, %c0_21], %33 {strides = array<i32>} : memref<16x64xf32, #tpu.memory_space<vmem>>, vector<16x64xf32>,
    return
  }
  func.func @transform_0(%arg0: i32) -> (i32, i32) {
    %c0_i32 = arith.constant 0 : i32
    %c0_i32_0 = arith.constant 0 : i32
    return %arg0, %c0_i32 : i32, i32
  }
  func.func @transform_1(%arg0: i32) -> (i32, i32) {
    %c0_i32 = arith.constant 0 : i32
    %c0_i32_0 = arith.constant 0 : i32
    %c0_i32_1 = arith.constant 0 : i32
    return %c0_i32, %c0_i32_0 : i32, i32
  }
  func.func @transform_2(%arg0: i32) -> (i32, i32) {
    %c0_i32 = arith.constant 0 : i32
    %c0_i32_0 = arith.constant 0 : i32
    %c0_i32_1 = arith.constant 0 : i32
    return %c0_i32, %c0_i32_0 : i32, i32
  }
  func.func @transform_3(%arg0: i32) -> (i32, i32) {
    %c0_i32 = arith.constant 0 : i32
    %c0_i32_0 = arith.constant 0 : i32
    %c0_i32_1 = arith.constant 0 : i32
    return %c0_i32, %c0_i32_0 : i32, i32
  }
  func.func @transform_4(%arg0: i32) -> (i32, i32) {
    %c0_i32 = arith.constant 0 : i32
    %c0_i32_0 = arith.constant 0 : i32
    %c0_i32_1 = arith.constant 0 : i32
    return %c0_i32, %c0_i32_0 : i32, i32
  }
  func.func @transform_5(%arg0: i32) -> (i32, i32) {
    %c0_i32 = arith.constant 0 : i32
    %c0_i32_0 = arith.constant 0 : i32
    %c0_i32_1 = arith.constant 0 : i32
    return %c0_i32, %c0_i32_0 : i32, i32
  }
  func.func @transform_6(%arg0: i32) -> (i32, i32) {
    %c0_i32 = arith.constant 0 : i32
    %c0_i32_0 = arith.constant 0 : i32
    %c0_i32_1 = arith.constant 0 : i32
    return %c0_i32, %c0_i32_0 : i32, i32
  }
  func.func @transform_7(%arg0: i32) -> (i32, i32) {
    %c0_i32 = arith.constant 0 : i32
    %c0_i32_0 = arith.constant 0 : i32
    return %c0_i32, %arg0 : i32, i32
  }
}

</mosaic_0001>

<llo_original>
// kernel: tpu_custom_call.1
$region0: #{tpu_custom_call.1}
  #allocation0 [shape = 'u32[]', space=smem, size = 0x4, offset = 0x4, fixed_abs, tag = 'smem constant byte address 0x4 - core index']
  #allocation1 [shape = 'u32[72,128]{1,0:T(1,128)}', space=vmem, size = 0x9000, scoped, tag = 'internal scratch']
  %s0 = inlined_call_operand.vmem [shape: f32[64,32], index: 0, kind: input, shape index: {}]
  %s1 = inlined_call_operand.vmem [shape: f32[64,32], index: 1, kind: input, shape index: {}]
  %s2 = inlined_call_operand.vmem [shape: f32[64,1], index: 2, kind: input, shape index: {}]
  %s3 = inlined_call_operand.vmem [shape: f32[64,64], index: 3, kind: input, shape index: {}]
  %s4 = inlined_call_operand.vmem [shape: f32[64,1], index: 4, kind: input, shape index: {}]
  %s5 = inlined_call_operand.vmem [shape: f32[16,64], index: 5, kind: input, shape index: {}]
  %s6 = inlined_call_operand.vmem [shape: f32[16,1], index: 6, kind: input, shape index: {}]
  %s7 = inlined_call_operand.hbm [shape: f32[16,64], index: 7, kind: output, shape index: {}]
  %s8 = sld [smem:[#allocation0]]
  $region38: #{tpu_custom_call.1} parent=0
    _
  %s10 = ssub.s32 1, %s8
  %s11 = scalar_select 0, %s10, %s8
  $region1: #{tpu_custom_call.1} parent=0
    #allocation2 [shape = 'u8[8192]{0}', space=vmem, size = 0x2000, scoped, tag = 'output window, operand 0, single buffered']
    #allocation3 [shape = 's32[1]{0}', space=sflag, size = 0x4, scoped, tag = 'scoped memory for tpu_custom_call.1']
    %12 = vsyncpa [#allocation3], 0
    // Predicated region
    $region2: #{tpu_custom_call.1} parent=1 // pred_check
      _
    $region3: #{tpu_custom_call.1} parent=1 // pred_check_branch
      %14 = sbr.rel (0) target = $region5
    $region4: #{tpu_custom_call.1} parent=1 // pred_region
      _
    $region5: #{tpu_custom_call.1} parent=1 // pred_fallthru
      _
    // Predicated region
    $region6: #{tpu_custom_call.1} parent=1 // pred_check
      _
    $region7: #{tpu_custom_call.1} parent=1 // pred_check_branch
      %16 = sbr.rel (0) target = $region9
    $region8: #{tpu_custom_call.1} parent=1 // pred_region
      _
    $region9: #{tpu_custom_call.1} parent=1 // pred_fallthru
      _
    // Predicated region
    $region10: #{tpu_custom_call.1} parent=1 // pred_check
      _
    $region11: #{tpu_custom_call.1} parent=1 // pred_check_branch
      %18 = sbr.rel (0) target = $region13
    $region12: #{tpu_custom_call.1} parent=1 // pred_region
      _
    $region13: #{tpu_custom_call.1} parent=1 // pred_fallthru
      _
    // Predicated region
    $region14: #{tpu_custom_call.1} parent=1 // pred_check
      _
    $region15: #{tpu_custom_call.1} parent=1 // pred_check_branch
      %20 = sbr.rel (0) target = $region17
    $region16: #{tpu_custom_call.1} parent=1 // pred_region
      _
    $region17: #{tpu_custom_call.1} parent=1 // pred_fallthru
      _
    // Predicated region
    $region18: #{tpu_custom_call.1} parent=1 // pred_check
      _
    $region19: #{tpu_custom_call.1} parent=1 // pred_check_branch
      %22 = sbr.rel (0) target = $region21
    $region20: #{tpu_custom_call.1} parent=1 // pred_region
      _
    $region21: #{tpu_custom_call.1} parent=1 // pred_fallthru
      _
    // Predicated region
    $region22: #{tpu_custom_call.1} parent=1 // pred_check
      _
    $region23: #{tpu_custom_call.1} parent=1 // pred_check_branch
      %24 = sbr.rel (0) target = $region25
    $region24: #{tpu_custom_call.1} parent=1 // pred_region
      _
    $region25: #{tpu_custom_call.1} parent=1 // pred_fallthru
      _
    // Predicated region
    $region26: #{tpu_custom_call.1} parent=1 // pred_check
      _
    $region27: #{tpu_custom_call.1} parent=1 // pred_check_branch
      %26 = sbr.rel (0) target = $region29
    $region28: #{tpu_custom_call.1} parent=1 // pred_region
      _
    $region29: #{tpu_custom_call.1} parent=1 // pred_fallthru
      _
    %v27 = vld [vmem:[%s0] sm:$0xff]
    %v28 = vld [vmem:[%s0 + $0x8] sm:$0xff]
    %v29 = vld [vmem:[%s0 + $0x10] sm:$0xff]
    %v30 = vld [vmem:[%s0 + $0x18] sm:$0xff]
    %v31 = vld [vmem:[%s0 + $0x20] sm:$0xff]
    %v32 = vld [vmem:[%s0 + $0x28] sm:$0xff]
    %v33 = vld [vmem:[%s0 + $0x30] sm:$0xff]
    %v34 = vld [vmem:[%s0 + $0x38] sm:$0xff]
    %v35 = vld [vmem:[%s1] sm:$0xff]
    %v36 = vld [vmem:[%s1 + $0x8] sm:$0xff]
    %v37 = vld [vmem:[%s1 + $0x10] sm:$0xff]
    %v38 = vld [vmem:[%s1 + $0x18] sm:$0xff]
    %v39 = vld [vmem:[%s1 + $0x20] sm:$0xff]
    %v40 = vld [vmem:[%s1 + $0x28] sm:$0xff]
    %v41 = vld [vmem:[%s1 + $0x30] sm:$0xff]
    %v42 = vld [vmem:[%s1 + $0x38] sm:$0xff]
    %v43 = vld [vmem:[%s2] sm:$0xff]
    %v44 = vld [vmem:[%s2 + $0x8] sm:$0xff]
    %v45 = vld [vmem:[%s2 + $0x10] sm:$0xff]
    %v46 = vld [vmem:[%s2 + $0x18] sm:$0xff]
    %v47 = vld [vmem:[%s2 + $0x20] sm:$0xff]
    %v48 = vld [vmem:[%s2 + $0x28] sm:$0xff]
    %v49 = vld [vmem:[%s2 + $0x30] sm:$0xff]
    %v50 = vld [vmem:[%s2 + $0x38] sm:$0xff]
    %52 = vset.pattern.permute.xlu0 0
    %53 = vperm.xlu0 %52, %v43
    %v54 = vpop.permute.xlu0 %53
    %57 = vset.pattern.permute.xlu0 0
    %58 = vperm.xlu0 %57, %v44
    %v59 = vpop.permute.xlu0 %58
    %62 = vset.pattern.permute.xlu0 0
    %63 = vperm.xlu0 %62, %v45
    %v64 = vpop.permute.xlu0 %63
    %67 = vset.pattern.permute.xlu0 0
    %68 = vperm.xlu0 %67, %v46
    %v69 = vpop.permute.xlu0 %68
    %72 = vset.pattern.permute.xlu0 0
    %73 = vperm.xlu0 %72, %v47
    %v74 = vpop.permute.xlu0 %73
    %77 = vset.pattern.permute.xlu0 0
    %78 = vperm.xlu0 %77, %v48
    %v79 = vpop.permute.xlu0 %78
    %82 = vset.pattern.permute.xlu0 0
    %83 = vperm.xlu0 %82, %v49
    %v84 = vpop.permute.xlu0 %83
    %87 = vset.pattern.permute.xlu0 0
    %88 = vperm.xlu0 %87, %v50
    %v89 = vpop.permute.xlu0 %88
    %vm91 = vcmask 261120
    %v93 = vsel %vm91, %v35, 0
    %v96 = vsel %vm91, %v36, 0
    %v99 = vsel %vm91, %v37, 0
    %v102 = vsel %vm91, %v38, 0
    %v105 = vsel %vm91, %v39, 0
    %v108 = vsel %vm91, %v40, 0
    %v111 = vsel %vm91, %v41, 0
    %v114 = vsel %vm91, %v42, 0
    %v117 = vsel %vm91, %v27, 0
    %v120 = vsel %vm91, %v28, 0
    %v123 = vsel %vm91, %v29, 0
    %v126 = vsel %vm91, %v30, 0
    %v129 = vsel %vm91, %v31, 0
    %v132 = vsel %vm91, %v32, 0
    %v135 = vsel %vm91, %v33, 0
    %v138 = vsel %vm91, %v34, 0
    %140 = vmatpush.xpose.msra.mxu0 0.0
    %141 = vmatpush.xpose.msra.mxu0 0.0
    %142 = vmatpush.xpose.msra.mxu0 0.0
    %143 = vmatpush.xpose.msra.mxu0 0.0
    %144 = vmatpush.xpose.msra.mxu0 0.0
    %145 = vmatpush.xpose.msra.mxu0 0.0
    %146 = vmatpush.xpose.msra.mxu0 0.0
    %147 = vmatpush.xpose.msra.mxu0 0.0
    %148 = vmatpush.xpose.msra.mxu0 %v138
    %149 = vmatpush.xpose.msra.mxu0 %v135
    %150 = vmatpush.xpose.msra.mxu0 %v132
    %151 = vmatpush.xpose.msra.mxu0 %v129
    %152 = vmatpush.xpose.msra.mxu0 %v126
    %153 = vmatpush.xpose.msra.mxu0 %v123
    %154 = vmatpush.xpose.msra.mxu0 %v120
    %155 = vmatpush.xpose.msra.mxu0 %v117
    %156 = vmatmul.f32.gmra.mxu0 %v93
    %v157 = vpop.f32.mrf.mxu0
    %v158 = vadd.f32 %v54, %v157
    %159 = vmatmul.f32.gmra.mxu0 %v96
    %v160 = vpop.f32.mrf.mxu0
    %v161 = vadd.f32 %v59, %v160
    %162 = vmatmul.f32.gmra.mxu0 %v99
    %v163 = vpop.f32.mrf.mxu0
    %v164 = vadd.f32 %v64, %v163
    %165 = vmatmul.f32.gmra.mxu0 %v102
    %v166 = vpop.f32.mrf.mxu0
    %v167 = vadd.f32 %v69, %v166
    %168 = vmatmul.f32.gmra.mxu0 %v105
    %v169 = vpop.f32.mrf.mxu0
    %v170 = vadd.f32 %v74, %v169
    %171 = vmatmul.f32.gmra.mxu0 %v108
    %v172 = vpop.f32.mrf.mxu0
    %v173 = vadd.f32 %v79, %v172
    %174 = vmatmul.f32.gmra.mxu0 %v111
    %v175 = vpop.f32.mrf.mxu0
    %v176 = vadd.f32 %v84, %v175
    %177 = vmatmul.f32.gmra.mxu0 %v114
    %v178 = vpop.f32.mrf.mxu0
    %v179 = vadd.f32 %v89, %v178
    %180 = vdwg.mxu0
    %v181 = vmax.f32 %v158, 0.0
    %v182 = vmax.f32 %v161, 0.0
    %v183 = vmax.f32 %v164, 0.0
    %v184 = vmax.f32 %v167, 0.0
    %v185 = vmax.f32 %v170, 0.0
    %v186 = vmax.f32 %v173, 0.0
    %v187 = vmax.f32 %v176, 0.0
    %v188 = vmax.f32 %v179, 0.0
    %v189 = vld [vmem:[%s3] sm:$0xff]
    %v190 = vld [vmem:[%s3 + $0x8] sm:$0xff]
    %v191 = vld [vmem:[%s3 + $0x10] sm:$0xff]
    %v192 = vld [vmem:[%s3 + $0x18] sm:$0xff]
    %v193 = vld [vmem:[%s3 + $0x20] sm:$0xff]
    %v194 = vld [vmem:[%s3 + $0x28] sm:$0xff]
    %v195 = vld [vmem:[%s3 + $0x30] sm:$0xff]
    %v196 = vld [vmem:[%s3 + $0x38] sm:$0xff]
    %v197 = vld [vmem:[%s4] sm:$0xff]
    %v198 = vld [vmem:[%s4 + $0x8] sm:$0xff]
    %v199 = vld [vmem:[%s4 + $0x10] sm:$0xff]
    %v200 = vld [vmem:[%s4 + $0x18] sm:$0xff]
    %v201 = vld [vmem:[%s4 + $0x20] sm:$0xff]
    %v202 = vld [vmem:[%s4 + $0x28] sm:$0xff]
    %v203 = vld [vmem:[%s4 + $0x30] sm:$0xff]
    %v204 = vld [vmem:[%s4 + $0x38] sm:$0xff]
    %206 = vset.pattern.permute.xlu0 0
    %207 = vperm.xlu0 %206, %v197
    %v208 = vpop.permute.xlu0 %207
    %211 = vset.pattern.permute.xlu0 0
    %212 = vperm.xlu0 %211, %v198
    %v213 = vpop.permute.xlu0 %212
    %216 = vset.pattern.permute.xlu0 0
    %217 = vperm.xlu0 %216, %v199
    %v218 = vpop.permute.xlu0 %217
    %221 = vset.pattern.permute.xlu0 0
    %222 = vperm.xlu0 %221, %v200
    %v223 = vpop.permute.xlu0 %222
    %226 = vset.pattern.permute.xlu0 0
    %227 = vperm.xlu0 %226, %v201
    %v228 = vpop.permute.xlu0 %227
    %231 = vset.pattern.permute.xlu0 0
    %232 = vperm.xlu0 %231, %v202
    %v233 = vpop.permute.xlu0 %232
    %236 = vset.pattern.permute.xlu0 0
    %237 = vperm.xlu0 %236, %v203
    %v238 = vpop.permute.xlu0 %237
    %241 = vset.pattern.permute.xlu0 0
    %242 = vperm.xlu0 %241, %v204
    %v243 = vpop.permute.xlu0 %242
    %vm245 = vcmask 523264
    %v247 = vsel %vm245, %v189, 0
    %v250 = vsel %vm245, %v190, 0
    %v253 = vsel %vm245, %v191, 0
    %v256 = vsel %vm245, %v192, 0
    %v259 = vsel %vm245, %v193, 0
    %v262 = vsel %vm245, %v194, 0
    %v265 = vsel %vm245, %v195, 0
    %v268 = vsel %vm245, %v196, 0
    %270 = vmatpush.msra.mxu0 0.0
    %271 = vmatpush.msra.mxu0 0.0
    %272 = vmatpush.msra.mxu0 0.0
    %273 = vmatpush.msra.mxu0 0.0
    %274 = vmatpush.msra.mxu0 0.0
    %275 = vmatpush.msra.mxu0 0.0
    %276 = vmatpush.msra.mxu0 0.0
    %277 = vmatpush.msra.mxu0 0.0
    %278 = vmatpush.msra.mxu0 %v188
    %279 = vmatpush.msra.mxu0 %v187
    %280 = vmatpush.msra.mxu0 %v186
    %281 = vmatpush.msra.mxu0 %v185
    %282 = vmatpush.msra.mxu0 %v184
    %283 = vmatpush.msra.mxu0 %v183
    %284 = vmatpush.msra.mxu0 %v182
    %285 = vmatpush.msra.mxu0 %v181
    %286 = vmatmul.f32.gmra.mxu0 %v247
    %v287 = vpop.f32.mrf.mxu0
    %v288 = vadd.f32 %v208, %v287
    %289 = vmatmul.f32.gmra.mxu0 %v250
    %v290 = vpop.f32.mrf.mxu0
    %v291 = vadd.f32 %v213, %v290
    %292 = vmatmul.f32.gmra.mxu0 %v253
    %v293 = vpop.f32.mrf.mxu0
    %v294 = vadd.f32 %v218, %v293
    %295 = vmatmul.f32.gmra.mxu0 %v256
    %v296 = vpop.f32.mrf.mxu0
    %v297 = vadd.f32 %v223, %v296
    %298 = vmatmul.f32.gmra.mxu0 %v259
    %v299 = vpop.f32.mrf.mxu0
    %v300 = vadd.f32 %v228, %v299
    %301 = vmatmul.f32.gmra.mxu0 %v262
    %v302 = vpop.f32.mrf.mxu0
    %v303 = vadd.f32 %v233, %v302
    %304 = vmatmul.f32.gmra.mxu0 %v265
    %v305 = vpop.f32.mrf.mxu0
    %v306 = vadd.f32 %v238, %v305
    %307 = vmatmul.f32.gmra.mxu0 %v268
    %v308 = vpop.f32.mrf.mxu0
    %v309 = vadd.f32 %v243, %v308
    %310 = vdwg.mxu0
    %v311 = vmax.f32 %v288, 0.0
    %v312 = vmax.f32 %v291, 0.0
    %v313 = vmax.f32 %v294, 0.0
    %v314 = vmax.f32 %v297, 0.0
    %v315 = vmax.f32 %v300, 0.0
    %v316 = vmax.f32 %v303, 0.0
    %v317 = vmax.f32 %v306, 0.0
    %v318 = vmax.f32 %v309, 0.0
    %v319 = vld [vmem:[%s5] sm:$0xff]
    %v320 = vld [vmem:[%s5 + $0x8] sm:$0xff]
    %v321 = vld [vmem:[%s6] sm:$0xff]
    %v322 = vld [vmem:[%s6 + $0x8] sm:$0xff]
    %324 = vset.pattern.permute.xlu0 0
    %325 = vperm.xlu0 %324, %v321
    %v326 = vpop.permute.xlu0 %325
    %329 = vset.pattern.permute.xlu0 0
    %330 = vperm.xlu0 %329, %v322
    %v331 = vpop.permute.xlu0 %330
    %v334 = vsel %vm245, %v319, 0
    %v337 = vsel %vm245, %v320, 0
    %339 = vmatpush.msra.mxu0 0.0
    %340 = vmatpush.msra.mxu0 0.0
    %341 = vmatpush.msra.mxu0 0.0
    %342 = vmatpush.msra.mxu0 0.0
    %343 = vmatpush.msra.mxu0 0.0
    %344 = vmatpush.msra.mxu0 0.0
    %345 = vmatpush.msra.mxu0 0.0
    %346 = vmatpush.msra.mxu0 0.0
    %347 = vmatpush.msra.mxu0 %v318
    %348 = vmatpush.msra.mxu0 %v317
    %349 = vmatpush.msra.mxu0 %v316
    %350 = vmatpush.msra.mxu0 %v315
    %351 = vmatpush.msra.mxu0 %v314
    %352 = vmatpush.msra.mxu0 %v313
    %353 = vmatpush.msra.mxu0 %v312
    %354 = vmatpush.msra.mxu0 %v311
    %355 = vmatmul.f32.gmra.mxu0 %v334
    %v356 = vpop.f32.mrf.mxu0
    %v357 = vadd.f32 %v326, %v356
    %358 = vmatmul.f32.gmra.mxu0 %v337
    %v359 = vpop.f32.mrf.mxu0
    %v360 = vadd.f32 %v331, %v359
    %361 = vdwg.mxu0
    %v362 = vsel %vm245, %v357, -inf
    %v363 = vsel %vm245, %v360, -inf
    %v364 = vmax.f32 %v362, %v363
    %v365 = vrot.slane %v364, 4
    %v366 = vmax.f32 %v364, %v365
    %v367 = vrot.slane %v366, 2
    %v368 = vmax.f32 %v366, %v367
    %v369 = vrot.slane %v368, 1
    %v370 = vmax.f32 %v368, %v369
    %v371 = vsub.f32 %v357, %v370
    %v372 = vsub.f32 %v360, %v370
    %v373 = vmul.f32 %v371, 1.442695
    %v374 = vpow.pop %v373
    %v375 = vmul.f32 %v372, 1.442695
    %v376 = vpow.pop %v375
    %v377 = vsel %vm245, %v374, 0.0
    %v378 = vsel %vm245, %v376, 0.0
    %v379 = vadd.f32 %v377, %v378
    %v380 = vrot.slane %v379, 4
    %v381 = vadd.f32 %v379, %v380
    %v382 = vrot.slane %v381, 2
    %v383 = vadd.f32 %v381, %v382
    %v384 = vrot.slane %v383, 1
    %v385 = vadd.f32 %v383, %v384
    %v386 = vrcp.pop %v385
    %v387 = vmul.f32 %v385, %v386
    %v388 = vsub.f32 2.0, %v387
    %v389 = vmul.f32 %v386, %v388
    %v390 = vmul.f32 %v374, %v389
    %v391 = vmul.f32 %v376, %v389
    %392 = vst.msk [vmem:[#allocation2] sm:$0xff] %vm245, %v390
    %393 = vst.msk [vmem:[#allocation2 + $0x8] sm:$0xff] %vm245, %v391
    // Predicated region
    $region30: #{tpu_custom_call.1} parent=1 // pred_check
      _
    $region31: #{tpu_custom_call.1} parent=1 // pred_check_branch
      %395 = sbr.rel (0) target = $region33
    $region32: #{tpu_custom_call.1} parent=1 // pred_region
      %397 = vsyncadd [#allocation3], 0
      %s398 = sshll.u32 [#allocation2], 4
      %s399 = int_to_ptr.vmem [resolvable:$true] %s398
      %s400 = sshll.u32 %s7, 4
      %s401 = int_to_ptr.hbm [resolvable:$true] %s400
      %406 = dma.vmem_to_hbm [thread:$0]  %s399, 256, %s401, [#allocation3], 128, 128, 8
    $region33: #{tpu_custom_call.1} parent=1 // pred_fallthru
      _
    // Predicated region
    $region34: #{tpu_custom_call.1} parent=1 // pred_check
      _
    $region35: #{tpu_custom_call.1} parent=1 // pred_check_branch
      %408 = sbr.rel (0) target = $region37
    $region36: #{tpu_custom_call.1} parent=1 // pred_region
      %410 = dma.done [#allocation3], 256
    $region37: #{tpu_custom_call.1} parent=1 // pred_fallthru
      _
    %411 = vsyncpa [#allocation3], 1

</llo_original>
